<compile_context>
chip_gen: v6e
topology: v6e:2x2x1
jax: 0.10.0
libtpu: 0.0.40
codegen_flags: <defaults>
</compile_context>

<pallas_src>
import functools

import jax
import jax.numpy as jnp
from jax.experimental import pallas as pl
from jax.experimental.pallas import tpu as pltpu


# --------------------------- Pallas kernel (fused) ---------------------------

def _sconv1d_kernel(x_ref, w_ref, b_ref, o_ref, *, batch, seq_len, k, pad, out_len):
    # x_ref: (B*L, Cin) f32   w_ref: (k*Cin, Cout) bf16   b_ref: (1, Cout) f32
    # o_ref: (B*Lout, Cout) f32
    cin = x_ref.shape[-1]
    w = w_ref[...]                        # weights resident once (grid size 1)
    bias = b_ref[...]
    x = x_ref[...].astype(jnp.bfloat16)   # VPU cast right after the DMA

    # Zero-padding happens here, in VMEM.  The pad block is rounded up to a
    # multiple of 8 sublanes so the sublane concatenation stays tile-aligned
    # whenever seq_len % 8 == 0.
    zrows = ((max(pad, 1) + 7) // 8) * 8 if pad > 0 else 0
    zpad = jnp.zeros((zrows, cin), jnp.bfloat16) if pad > 0 else None

    per_batch = []
    for b in range(batch):                # static unroll; everything stays in VMEM
        xb = x[b * seq_len:(b + 1) * seq_len, :]                     # (L, Cin)
        if pad > 0:
            xb = jnp.concatenate([zpad, xb, zpad], axis=0)           # (L+2*zrows, Cin)
        base = zrows - pad
        taps = [xb[base + t: base + t + out_len, :] for t in range(k)]
        per_batch.append(taps[0] if k == 1 else jnp.concatenate(taps, axis=-1))

    # im2col LHS: (B*Lout, k*Cin); one MXU matmul, f32 accumulation.
    lhs = per_batch[0] if batch == 1 else jnp.concatenate(per_batch, axis=0)
    y = jnp.dot(lhs, w, preferred_element_type=jnp.float32) + bias
    o_ref[...] = y.astype(o_ref.dtype)


# ------------------- weight synthesis (plain-JAX param setup) ----------------

def synthesize_conv1d_weight(template, conv_w, conv_b):
    # nn.Conv2d(template): (1, Ct, Ht, Wt) -> (1, k, in_dim, out_dim)
    # .squeeze(0).permute(2, 1, 0) -> (out_dim, in_dim, k)  (F.conv1d weight)
    y = jax.lax.conv_general_dilated(
        template, conv_w, window_strides=(1, 1), padding='VALID',
        dimension_numbers=('NCHW', 'OIHW', 'NCHW'))
    y = y + conv_b[None, :, None, None]
    return jnp.transpose(y[0], (2, 1, 0))


# ----------------------------------- wrapper ---------------------------------

def sconv1d_pallas(vec, template, conv_w, conv_b, bias, *, kernel_size,
                   stride=1, padding=0):
    assert kernel_size % 2 == 1, 'Only support odd kernel size.'
    if stride != 1:
        raise NotImplementedError("TODO(synk): stride > 1 not implemented")
    B, L, Cin = vec.shape
    weight = synthesize_conv1d_weight(template, conv_w, conv_b)   # (Cout, Cin, k)
    Cout, _, k = weight.shape
    assert k == kernel_size
    Lout = L + 2 * padding - (k - 1)
    assert Lout > 0

    # Tap-major (k, Cin, Cout) flattened to the im2col layout (k*Cin, Cout);
    # the bf16 cast fuses into the weight-synthesis XLA chain (half the DMA).
    w_mat = jnp.transpose(weight, (2, 1, 0)).reshape(k * Cin, Cout).astype(jnp.bfloat16)
    if bias is None:
        bias = jnp.zeros((Cout,), vec.dtype)
    bias2 = bias.reshape(1, Cout).astype(jnp.float32)
    x2 = vec.reshape(B * L, Cin)          # free reshape: batch folded into rows

    kern = functools.partial(_sconv1d_kernel, batch=B, seq_len=L, k=k,
                             pad=padding, out_len=Lout)
    out2 = pl.pallas_call(
        kern,
        out_shape=jax.ShapeDtypeStruct((B * Lout, Cout), vec.dtype),
        grid=(1,),                         # single fused step
        in_specs=[
            pl.BlockSpec((B * L, Cin), lambda i: (0, 0)),
            pl.BlockSpec((k * Cin, Cout), lambda i: (0, 0)),
            pl.BlockSpec((1, Cout), lambda i: (0, 0)),
        ],
        out_specs=pl.BlockSpec((B * Lout, Cout), lambda i: (0, 0)),
        compiler_params=pltpu.CompilerParams(dimension_semantics=("arbitrary",)),
    )(x2, w_mat, bias2)
    return out2.reshape(B, Lout, Cout)


# ------------------------------ plain-JAX reference --------------------------

def sconv1d_ref(vec, template, conv_w, conv_b, bias, *, stride=1, padding=0,
                cast_bf16=False):
    weight = synthesize_conv1d_weight(template, conv_w, conv_b)
    v = jnp.transpose(vec, (0, 2, 1))                    # (B, C, L)
    if cast_bf16:                                        # mirror kernel numerics
        v = v.astype(jnp.bfloat16)
        weight = weight.astype(jnp.bfloat16)
    out = jax.lax.conv_general_dilated(
        v, weight, window_strides=(stride,), padding=[(padding, padding)],
        dimension_numbers=('NCH', 'OIH', 'NCH'),
        preferred_element_type=jnp.float32)
    out = out + bias[None, :, None]
    return jnp.transpose(out, (0, 2, 1))


# ----------------------------------- main ------------------------------------

if __name__ == "__main__":
    key = jax.random.PRNGKey(0)
    B, L = 2, 16
    in_dim, out_dim, k_size, padding = 32, 32, 3, 1
    Ct, Ht, Wt = 2, 36, 36
    kh, kw = Ht - in_dim + 1, Wt - out_dim + 1          # nn.Conv2d kernel in SConv1d

    keys = jax.random.split(key, 6)
    vec = jax.random.normal(keys[0], (B, L, in_dim), jnp.float32)
    template = jax.random.normal(keys[1], (1, Ct, Ht, Wt), jnp.float32)
    conv_w = jax.random.normal(keys[2], (k_size, Ct, kh, kw), jnp.float32) / jnp.sqrt(Ct * kh * kw)
    conv_b = 0.01 * jax.random.normal(keys[3], (k_size,), jnp.float32)
    bias = 0.1 * jax.random.normal(keys[4], (out_dim,), jnp.float32)

    # --- k=3 / padding=1 ("same") path ---
    out = sconv1d_pallas(vec, template, conv_w, conv_b, bias,
                         kernel_size=k_size, padding=padding)
    out = jax.block_until_ready(out)
    Lout = L + 2 * padding - (k_size - 1)
    assert out.shape == (B, Lout, out_dim), out.shape

    ref_bf16 = sconv1d_ref(vec, template, conv_w, conv_b, bias,
                           padding=padding, cast_bf16=True)
    ref_f32 = sconv1d_ref(vec, template, conv_w, conv_b, bias,
                          padding=padding, cast_bf16=False)
    err_b = float(jnp.max(jnp.abs(out - ref_bf16)))
    err_f = float(jnp.max(jnp.abs(out - ref_f32)))
    assert jnp.allclose(out, ref_bf16, atol=1e-2, rtol=1e-2), err_b   # kernel mechanics
    assert jnp.allclose(out, ref_f32, atol=2e-1, rtol=5e-2), err_f    # bf16-vs-f32 slack

    # --- k=1 / padding=0 (pointwise) path ---
    conv_w1 = jax.random.normal(keys[5], (1, Ct, kh, kw), jnp.float32) / jnp.sqrt(Ct * kh * kw)
    conv_b1 = jnp.zeros((1,), jnp.float32)
    out1 = sconv1d_pallas(vec, template, conv_w1, conv_b1, bias,
                          kernel_size=1, padding=0)
    out1 = jax.block_until_ready(out1)
    ref1 = sconv1d_ref(vec, template, conv_w1, conv_b1, bias,
                       padding=0, cast_bf16=True)
    assert out1.shape == (B, L, out_dim), out1.shape
    assert jnp.allclose(out1, ref1, atol=1e-2, rtol=1e-2)

    print("KERNEL_OK")
</pallas_src>

<mosaic_0001>
module attributes {stable_mosaic.version = 11 : i64} {
  func.func @_sconv1d_kernel(%arg0: i32, %arg1: memref<32x32xf32, #tpu.memory_space<vmem>>, %arg2: memref<96x32xbf16, #tpu.memory_space<vmem>>, %arg3: memref<1x32xf32, #tpu.memory_space<vmem>>, %arg4: memref<32x32xf32, #tpu.memory_space<vmem>>) attributes {dimension_semantics = [#tpu.dimension_semantics<arbitrary>], iteration_bounds = array<i64: 1>, scalar_prefetch = 0 : i64, scratch_operands = 0 : i64, tpu.core_type = #tpu.core_type<tc>, window_params = [{pipeline_mode = #tpu.pipeline_mode<synchronous>, transform_indices = @transform_0, window_bounds = array<i64: 32, 32>}, {pipeline_mode = #tpu.pipeline_mode<synchronous>, transform_indices = @transform_1, window_bounds = array<i64: 96, 32>}, {pipeline_mode = #tpu.pipeline_mode<synchronous>, transform_indices = @transform_2, window_bounds = array<i64: 1, 32>}, {pipeline_mode = #tpu.pipeline_mode<synchronous>, transform_indices = @transform_3, window_bounds = array<i64: 32, 32>}]} {
    %c0 = arith.constant 0 : index
    %c0_0 = arith.constant 0 : index
    %0 = vector.load %arg2[%c0, %c0_0] : memref<96x32xbf16, #tpu.memory_space<vmem>>, vector<96x32xbf16>
    %c0_1 = arith.constant 0 : index
    %c0_2 = arith.constant 0 : index
    %1 = vector.load %arg3[%c0_1, %c0_2] : memref<1x32xf32, #tpu.memory_space<vmem>>, vector<1x32xf32>
    %c0_3 = arith.constant 0 : index
    %c0_4 = arith.constant 0 : index
    %2 = vector.load %arg1[%c0_3, %c0_4] : memref<32x32xf32, #tpu.memory_space<vmem>>, vector<32x32xf32>
    %3 = arith.truncf %2 : vector<32x32xf32> to vector<32x32xbf16>
    %cst = arith.constant 0.000000e+00 : bf16
    %4 = vector.broadcast %cst : bf16 to vector<8x32xbf16>
    %5 = vector.extract_strided_slice %3 {offsets = [0, 0], sizes = [16, 32], strides = [1, 1]} : vector<32x32xbf16> to vector<16x32xbf16>
    %6 = tpu.concatenate %4, %5, %4 in 0 : vector<8x32xbf16>, vector<16x32xbf16>, vector<8x32xbf16> -> vector<32x32xbf16>
    %7 = vector.extract_strided_slice %6 {offsets = [7, 0], sizes = [16, 32], strides = [1, 1]} : vector<32x32xbf16> to vector<16x32xbf16>
    %8 = vector.extract_strided_slice %6 {offsets = [8, 0], sizes = [16, 32], strides = [1, 1]} : vector<32x32xbf16> to vector<16x32xbf16>
    %9 = vector.extract_strided_slice %6 {offsets = [9, 0], sizes = [16, 32], strides = [1, 1]} : vector<32x32xbf16> to vector<16x32xbf16>
    %10 = tpu.concatenate %7, %8, %9 in 1 : vector<16x32xbf16>, vector<16x32xbf16>, vector<16x32xbf16> -> vector<16x96xbf16>
    %11 = vector.extract_strided_slice %3 {offsets = [16, 0], sizes = [16, 32], strides = [1, 1]} : vector<32x32xbf16> to vector<16x32xbf16>
    %12 = tpu.concatenate %4, %11, %4 in 0 : vector<8x32xbf16>, vector<16x32xbf16>, vector<8x32xbf16> -> vector<32x32xbf16>
    %13 = vector.extract_strided_slice %12 {offsets = [7, 0], sizes = [16, 32], strides = [1, 1]} : vector<32x32xbf16> to vector<16x32xbf16>
    %14 = vector.extract_strided_slice %12 {offsets = [8, 0], sizes = [16, 32], strides = [1, 1]} : vector<32x32xbf16> to vector<16x32xbf16>
    %15 = vector.extract_strided_slice %12 {offsets = [9, 0], sizes = [16, 32], strides = [1, 1]} : vector<32x32xbf16> to vector<16x32xbf16>
    %16 = tpu.concatenate %13, %14, %15 in 1 : vector<16x32xbf16>, vector<16x32xbf16>, vector<16x32xbf16> -> vector<16x96xbf16>
    %17 = tpu.concatenate %10, %16 in 0 : vector<16x96xbf16>, vector<16x96xbf16> -> vector<32x96xbf16>
    %cst_5 = arith.constant dense<0.000000e+00> : vector<32x32xf32>
    %18 = tpu.matmul %17, %0, %cst_5 {dimension_numbers = #tpu.dot_dimension_numbers<[1], [0], [0], [1], [0, 0, 1, 1], [], []>} : vector<32x96xbf16>, vector<96x32xbf16>, vector<32x32xf32> -> vector<32x32xf32>
    %19 = vector.broadcast %1 : vector<1x32xf32> to vector<32x32xf32>
    %20 = arith.addf %18, %19 : vector<32x32xf32>
    %c0_6 = arith.constant 0 : index
    %c0_7 = arith.constant 0 : index
    %21 = vector.load %arg4[%c0_6, %c0_7] : memref<32x32xf32, #tpu.memory_space<vmem>>, vector<32x32xf32>
    tpu.vector_store %arg4[%c0_6, %c0_7], %20 {strides = array<i32>} : memref<32x32xf32, #tpu.memory_space<vmem>>, vector<32x32xf32>,
    return
  }
  func.func @transform_0(%arg0: i32) -> (i32, i32) {
    %c0_i32 = arith.constant 0 : i32
    %c0_i32_0 = arith.constant 0 : i32
    %c0_i32_1 = arith.constant 0 : i32
    return %c0_i32, %c0_i32_0 : i32, i32
  }
  func.func @transform_1(%arg0: i32) -> (i32, i32) {
    %c0_i32 = arith.constant 0 : i32
    %c0_i32_0 = arith.constant 0 : i32
    %c0_i32_1 = arith.constant 0 : i32
    return %c0_i32, %c0_i32_0 : i32, i32
  }
  func.func @transform_2(%arg0: i32) -> (i32, i32) {
    %c0_i32 = arith.constant 0 : i32
    %c0_i32_0 = arith.constant 0 : i32
    %c0_i32_1 = arith.constant 0 : i32
    return %c0_i32, %c0_i32_0 : i32, i32
  }
  func.func @transform_3(%arg0: i32) -> (i32, i32) {
    %c0_i32 = arith.constant 0 : i32
    %c0_i32_0 = arith.constant 0 : i32
    %c0_i32_1 = arith.constant 0 : i32
    return %c0_i32, %c0_i32_0 : i32, i32
  }
}

</mosaic_0001>

<llo_original>
// kernel: tpu_custom_call.1
$region0: #{tpu_custom_call.1}
  #allocation0 [shape = 'u32[]', space=smem, size = 0x4, offset = 0x4, fixed_abs, tag = 'smem constant byte address 0x4 - core index']
  #allocation1 [shape = 'u32[144,128]{1,0:T(1,128)}', space=vmem, size = 0x12000, scoped, tag = 'internal scratch']
  %s0 = inlined_call_operand.vmem [shape: f32[32,32], index: 0, kind: input, shape index: {}]
  %s1 = inlined_call_operand.vmem [shape: bf16[96,32], index: 1, kind: input, shape index: {}]
  %s2 = inlined_call_operand.vmem [shape: f32[1,32], index: 2, kind: input, shape index: {}]
  %s3 = inlined_call_operand.hbm [shape: f32[32,32], index: 3, kind: output, shape index: {}]
  %s4 = sld [smem:[#allocation0]]
  $region22: #{tpu_custom_call.1} parent=0
    _
  %s6 = ssub.s32 1, %s4
  %s7 = scalar_select 0, %s6, %s4
  $region1: #{tpu_custom_call.1} parent=0
    #allocation2 [shape = 'u8[16384]{0}', space=vmem, size = 0x4000, scoped, tag = 'output window, operand 0, single buffered']
    #allocation3 [shape = 's32[1]{0}', space=sflag, size = 0x4, scoped, tag = 'scoped memory for tpu_custom_call.1']
    %8 = vsyncpa [#allocation3], 0
    // Predicated region
    $region2: #{tpu_custom_call.1} parent=1 // pred_check
      _
    $region3: #{tpu_custom_call.1} parent=1 // pred_check_branch
      %10 = sbr.rel (0) target = $region5
    $region4: #{tpu_custom_call.1} parent=1 // pred_region
      _
    $region5: #{tpu_custom_call.1} parent=1 // pred_fallthru
      _
    // Predicated region
    $region6: #{tpu_custom_call.1} parent=1 // pred_check
      _
    $region7: #{tpu_custom_call.1} parent=1 // pred_check_branch
      %12 = sbr.rel (0) target = $region9
    $region8: #{tpu_custom_call.1} parent=1 // pred_region
      _
    $region9: #{tpu_custom_call.1} parent=1 // pred_fallthru
      _
    // Predicated region
    $region10: #{tpu_custom_call.1} parent=1 // pred_check
      _
    $region11: #{tpu_custom_call.1} parent=1 // pred_check_branch
      %14 = sbr.rel (0) target = $region13
    $region12: #{tpu_custom_call.1} parent=1 // pred_region
      _
    $region13: #{tpu_custom_call.1} parent=1 // pred_fallthru
      _
    %v16 = vld [vmem:[%s1] sm:$0xf]
    %v17 = vld [vmem:[%s1 + $0x4] sm:$0xf]
    %v18 = vld [vmem:[%s1 + $0x8] sm:$0xf]
    %v19 = vld [vmem:[%s1 + $0xc] sm:$0xf]
    %v20 = vld [vmem:[%s1 + $0x10] sm:$0xf]
    %v21 = vld [vmem:[%s1 + $0x14] sm:$0xf]
    %v22 = vld [vmem:[%s1 + $0x18] sm:$0xf]
    %v23 = vld [vmem:[%s1 + $0x1c] sm:$0xf]
    %v24 = vld [vmem:[%s1 + $0x20] sm:$0xf]
    %v25 = vld [vmem:[%s1 + $0x24] sm:$0xf]
    %v26 = vld [vmem:[%s1 + $0x28] sm:$0xf]
    %v27 = vld [vmem:[%s1 + $0x2c] sm:$0xf]
    %v28 = vld [vmem:[%s2] sm:$0x1]
    %v29 = vld [vmem:[%s0] sm:$0xff]
    %v30 = vld [vmem:[%s0 + $0x8] sm:$0xff]
    %v31 = vld [vmem:[%s0 + $0x10] sm:$0xff]
    %v32 = vld [vmem:[%s0 + $0x18] sm:$0xff]
    %v33 = vpack.c.bf16 %v30, %v29
    %v34 = vpack.c.bf16 %v32, %v31
    %v36 = vrot.slane %v33, 4
    %vm37 = vcmask 1043456
    %v40 = vsel %vm37, 0, %v36
    %v41 = vsel %vm37, %v36, 0
    %vm42 = vsmask.f32 7424
    %v43 = vshrl.u32 %v40, 16
    %v45 = vshll.u32 %v40, 16
    %v47 = vrot.slane %v45, 1
    %v48 = vor.u32 %v43, %v47
    %v49 = vshll.u32 %v41, 16
    %v51 = vrot.slane %v49, 1
    %v52 = vsel %vm42, %v48, %v51
    %v53 = vshrl.u32 %v41, 16
    %v55 = vor.u32 %v53, %v51
    %56 = vrot.lane.b32.xlu0 %v52, 32
    %v57 = vpop.permute.xlu0 %56
    %58 = vrot.lane.b32.xlu0 %v55, 32
    %v59 = vpop.permute.xlu0 %58
    %vm62 = vcmask 1046528
    %v63 = vrot.slane %v40, 1
    %v64 = vrot.slane %v41, 1
    %v65 = vsel %vm62, %v63, %v64
    %66 = vrot.lane.b32.xlu0 %v65, 64
    %v67 = vpop.permute.xlu0 %66
    %68 = vrot.lane.b32.xlu0 %v64, 64
    %v69 = vpop.permute.xlu0 %68
    %vm70 = vcmask 261120
    %v72 = vsel %vm70, %v40, %v57
    %v74 = vsel %vm70, %v41, %v59
    %vm75 = vcmask 523264
    %v77 = vsel %vm75, %v72, %v67
    %v79 = vsel %vm75, %v74, %v69
    %v81 = vrot.slane %v34, 4
    %v83 = vsel %vm37, 0, %v81
    %v84 = vsel %vm37, %v81, 0
    %v85 = vshrl.u32 %v83, 16
    %v87 = vshll.u32 %v83, 16
    %v89 = vrot.slane %v87, 1
    %v90 = vor.u32 %v85, %v89
    %v91 = vshll.u32 %v84, 16
    %v93 = vrot.slane %v91, 1
    %v94 = vsel %vm42, %v90, %v93
    %v95 = vshrl.u32 %v84, 16
    %v97 = vor.u32 %v95, %v93
    %98 = vrot.lane.b32.xlu0 %v94, 32
    %v99 = vpop.permute.xlu0 %98
    %100 = vrot.lane.b32.xlu0 %v97, 32
    %v101 = vpop.permute.xlu0 %100
    %v104 = vrot.slane %v83, 1
    %v105 = vrot.slane %v84, 1
    %v106 = vsel %vm62, %v104, %v105
    %107 = vrot.lane.b32.xlu0 %v106, 64
    %v108 = vpop.permute.xlu0 %107
    %109 = vrot.lane.b32.xlu0 %v105, 64
    %v110 = vpop.permute.xlu0 %109
    %v112 = vsel %vm70, %v83, %v99
    %v114 = vsel %vm70, %v84, %v101
    %v116 = vsel %vm75, %v112, %v108
    %v118 = vsel %vm75, %v114, %v110
    %vm119 = vsmask.f32 4352
    %v120 = vshrl.u32 %v77, 16
    %v122 = vrot.slane %v120, 3
    %v123 = vshll.u32 %v77, 16
    %v125 = vrot.slane %v123, 4
    %v126 = vor.u32 %v122, %v125
    %v127 = vshrl.u32 %v79, 16
    %v129 = vrot.slane %v127, 3
    %v130 = vshll.u32 %v79, 16
    %v132 = vrot.slane %v130, 4
    %v133 = vor.u32 %v129, %v132
    %v134 = vsel %vm119, %v126, %v133
    %v135 = vshrl.u32 %v116, 16
    %v137 = vrot.slane %v135, 3
    %v138 = vshll.u32 %v116, 16
    %v140 = vrot.slane %v138, 4
    %v141 = vor.u32 %v137, %v140
    %v142 = vshrl.u32 %v118, 16
    %v144 = vrot.slane %v142, 3
    %v145 = vshll.u32 %v118, 16
    %v147 = vrot.slane %v145, 4
    %v148 = vor.u32 %v144, %v147
    %v149 = vsel %vm119, %v141, %v148
    %v151 = vlaneseq
    %v152 = vshrl.u32 %v151, 7
    %v153 = vsub.s32 0, %v152
    %v154 = vrot.slane %v28, %v153
    %v168 = vunpack.c.l.b16 %v16
    %v169 = vunpack.c.l.b16 %v17
    %v170 = vunpack.c.l.b16 %v18
    %v171 = vunpack.c.l.b16 %v19
    %v172 = vunpack.c.l.b16 %v20
    %v173 = vunpack.c.l.b16 %v21
    %v174 = vunpack.c.l.b16 %v22
    %v175 = vunpack.c.l.b16 %v23
    %v176 = vunpack.c.l.b16 %v24
    %v177 = vunpack.c.l.b16 %v25
    %v178 = vunpack.c.l.b16 %v26
    %v179 = vunpack.c.l.b16 %v27
    %v180 = vpack.c.b16 %v169, %v168
    %v181 = vpack.c.b16 %v171, %v170
    %v182 = vpack.c.b16 %v173, %v172
    %v183 = vpack.c.b16 %v175, %v174
    %v184 = vpack.c.b16 %v177, %v176
    %v185 = vpack.c.b16 %v179, %v178
    %vm192 = vcmask 785408
    %v194 = vsel %vm192, %v134, 0
    %v197 = vsel %vm192, %v149, 0
    %199 = vmatprep.subr.bf16.mxu0 0
    %200 = vmatpush1.bf16.msra.mxu0 0
    %201 = vmatprep.subr.bf16.mxu0 0
    %202 = vmatpush1.bf16.msra.mxu0 0
    %203 = vmatprep.subr.bf16.mxu0 0
    %204 = vmatpush1.bf16.msra.mxu0 %v185
    %205 = vmatprep.subr.bf16.mxu0 0
    %206 = vmatpush1.bf16.msra.mxu0 %v184
    %207 = vmatprep.subr.bf16.mxu0 0
    %208 = vmatpush1.bf16.msra.mxu0 %v183
    %209 = vmatprep.subr.bf16.mxu0 0
    %210 = vmatpush1.bf16.msra.mxu0 %v182
    %211 = vmatprep.subr.bf16.mxu0 0
    %212 = vmatpush1.bf16.msra.mxu0 %v181
    %213 = vmatprep.subr.bf16.mxu0 0
    %214 = vmatpush1.bf16.msra.mxu0 %v180
    %215 = vmatprep.subr.bf16.mxu0 0
    %216 = vmatpush2.bf16.msra.mxu0 0
    %217 = vmatprep.subr.bf16.mxu0 0
    %218 = vmatpush2.bf16.msra.mxu0 0
    %219 = vmatprep.subr.bf16.mxu0 0
    %220 = vmatpush2.bf16.msra.mxu0 0
    %221 = vmatprep.subr.bf16.mxu0 0
    %222 = vmatpush2.bf16.msra.mxu0 0
    %223 = vmatprep.subr.bf16.mxu0 0
    %224 = vmatpush2.bf16.msra.mxu0 0
    %225 = vmatprep.subr.bf16.mxu0 0
    %226 = vmatpush2.bf16.msra.mxu0 0
    %227 = vmatprep.subr.bf16.mxu0 0
    %228 = vmatpush2.bf16.msra.mxu0 0
    %229 = vmatprep.subr.bf16.mxu0 0
    %230 = vmatpush2.bf16.msra.mxu0 0
    %231 = vmatprep.mubr.bf16.mxu0 0
    %232 = vmatmul.mubr.bf16.gmra.mxu0 %v194
    %v233 = vpop.f32.mrf.mxu0
    %v234 = vadd.f32 %v154, %v233
    %v235 = vpop.f32.mrf.mxu0
    %v236 = vpop.f32.mrf.mxu0
    %v237 = vadd.f32 %v154, %v236
    %v238 = vpop.f32.mrf.mxu0
    %239 = vmatprep.mubr.bf16.mxu0 0
    %240 = vmatmul.mubr.bf16.gmra.mxu0 %v197
    %v241 = vpop.f32.mrf.mxu0
    %v242 = vadd.f32 %v154, %v241
    %v243 = vpop.f32.mrf.mxu0
    %v244 = vpop.f32.mrf.mxu0
    %v245 = vadd.f32 %v154, %v244
    %v246 = vpop.f32.mrf.mxu0
    %247 = vdwg.mxu0
    %248 = vst.msk [vmem:[#allocation2] sm:$0xff] %vm70, %v234
    %249 = vst.msk [vmem:[#allocation2 + $0x8] sm:$0xff] %vm70, %v237
    %250 = vst.msk [vmem:[#allocation2 + $0x10] sm:$0xff] %vm70, %v242
    %251 = vst.msk [vmem:[#allocation2 + $0x18] sm:$0xff] %vm70, %v245
    // Predicated region
    $region14: #{tpu_custom_call.1} parent=1 // pred_check
      _
    $region15: #{tpu_custom_call.1} parent=1 // pred_check_branch
      %253 = sbr.rel (0) target = $region17
    $region16: #{tpu_custom_call.1} parent=1 // pred_region
      %s255 = ssub.s32 512, 512
      %256 = vsyncadd [#allocation3], %s255
      %s257 = sshll.u32 [#allocation2], 4
      %s258 = int_to_ptr.vmem [resolvable:$true] %s257
      %263 = dma.vmem_to_hbm [thread:$0]  %s258, 512, %s3, [#allocation3], 128, 128, 8
    $region17: #{tpu_custom_call.1} parent=1 // pred_fallthru
      _
    // Predicated region
    $region18: #{tpu_custom_call.1} parent=1 // pred_check
      _
    $region19: #{tpu_custom_call.1} parent=1 // pred_check_branch
      %265 = sbr.rel (0) target = $region21
    $region20: #{tpu_custom_call.1} parent=1 // pred_region
      %266 = dma.done [#allocation3], 512
    $region21: #{tpu_custom_call.1} parent=1 // pred_fallthru
      _
    %267 = vsyncpa [#allocation3], 1

</llo_original>
